<compile_context>
chip_gen: v5e
topology: v5e:2x2
jax: 0.10.0
libtpu: 0.0.40
codegen_flags: <defaults>
</compile_context>

<pallas_src>
import jax
import jax.numpy as jnp
from jax.experimental import pallas as pl
from jax.experimental.pallas import tpu as pltpu


_LANE = 128                      # vreg lane width
_MAX_W = 8192                    # widest lane extent we try
_SMALL_BYPASS_BYTES = 1 << 20    # below ~1 MiB/operand, plain XLA multiply wins


def _cmul_kernel(a_ref, b_ref, o_ref):
    # Pure elementwise multiply on the VPU over the current VMEM tile.
    o_ref[...] = a_ref[...] * b_ref[...]


def _cdiv(a: int, b: int) -> int:
    return -(-a // b)


def _sublane_min(dtype) -> int:
    """Minimum second-to-last block extent for this dtype's packing."""
    itemsize = jnp.dtype(dtype).itemsize
    if itemsize >= 4:
        return 8
    if itemsize == 2:
        return 16
    return 32


def _tiling_params():
    """Generation-dependent (tile_bytes_per_operand, vmem_limit_bytes)."""
    vmem_bytes = 64 << 20  # conservative default: v7x per-TC VMEM
    try:
        info = pltpu.get_tpu_info()
        cap = getattr(info, "vmem_capacity_bytes", None)
        if cap:
            vmem_bytes = int(cap)
    except Exception:
        pass
    if vmem_bytes >= (96 << 20):
        # v5e / v6e: 128 MiB physical VMEM -> bigger tiles, generous scoped limit.
        # 3 arrays x 2 buffers x 12 MiB = 72 MiB <= 80 MiB limit.
        return 12 << 20, 80 << 20
    # v7x: 64 MiB per TC. 3 arrays x 2 buffers x 7 MiB = 42 MiB; 54 MiB limit
    # leaves >= 8 MiB headroom for internal scratch.
    return 7 << 20, 54 << 20


def _cmul_flat_aligned(a_flat: jax.Array, b_flat: jax.Array) -> jax.Array:
    """Elementwise product of two 1-D, 128-aligned, same-dtype arrays."""
    total = a_flat.shape[0]
    dtype = a_flat.dtype
    itemsize = jnp.dtype(dtype).itemsize
    sub_min = _sublane_min(dtype)
    tile_bytes, vmem_limit = _tiling_params()

    # Widest lane extent W (multiple of 128, <= _MAX_W) that exactly divides
    # the flat length -> lane-dense slab, zero row padding, unmasked stores.
    m = total // _LANE
    k = min(_MAX_W // _LANE, m)
    while m % k:
        k -= 1
    W = k * _LANE
    rows = total // W

    # Row tile: ~tile_bytes per operand, multiple of the dtype's sublane
    # minimum. Small arrays take the full row extent (always legal).
    tr = max(sub_min, (tile_bytes // (W * itemsize)) // sub_min * sub_min)
    if tr > rows:
        tr = rows
    grid_rows = _cdiv(rows, tr)

    # Prefer an even grid (>= 2 steps) so v7x's two TensorCores both get work
    # on the "parallel" axis; boundary block stays masked/correct.
    if grid_rows % 2 == 1 and rows > sub_min:
        desired = grid_rows + 1
        tr_even = min(rows, max(sub_min, _cdiv(_cdiv(rows, desired), sub_min) * sub_min))
        if _cdiv(rows, tr_even) % 2 == 0:
            tr = tr_even
            grid_rows = _cdiv(rows, tr)

    a2 = a_flat.reshape(rows, W)
    b2 = b_flat.reshape(rows, W)

    out2 = pl.pallas_call(
        _cmul_kernel,
        out_shape=jax.ShapeDtypeStruct((rows, W), dtype),
        grid_spec=pltpu.PrefetchScalarGridSpec(
            num_scalar_prefetch=0,
            grid=(grid_rows,),
            in_specs=[
                pl.BlockSpec((tr, W), lambda i: (i, 0)),
                pl.BlockSpec((tr, W), lambda i: (i, 0)),
            ],
            out_specs=pl.BlockSpec((tr, W), lambda i: (i, 0)),
        ),
        compiler_params=pltpu.CompilerParams(
            dimension_semantics=("parallel",),
            vmem_limit_bytes=int(vmem_limit),
        ),
    )(a2, b2)
    return out2.reshape(-1)


def cmul(a: jax.Array, b: jax.Array, *, min_pallas_bytes: int = _SMALL_BYPASS_BYTES) -> jax.Array:
    """Elementwise product a * b (CMul forward). a, b: same shape / dtype."""
    assert a.shape == b.shape, (a.shape, b.shape)
    assert a.dtype == b.dtype, (a.dtype, b.dtype)

    orig_shape = a.shape
    total = a.size
    itemsize = jnp.dtype(a.dtype).itemsize

    # Tiny tensors (or empty): the pallas_call fixed cost dominates; a fused
    # XLA multiply is strictly faster.
    if total == 0 or total * itemsize < min_pallas_bytes:
        return a * b

    a_flat = a.reshape(-1)
    b_flat = b.reshape(-1)
    rem = total % _LANE

    if rem == 0:
        out_flat = _cmul_flat_aligned(a_flat, b_flat)
    else:
        aligned = total - rem
        if aligned == 0:
            return a * b
        # Kernel on the 128-aligned prefix; tiny tail via plain XLA multiply.
        head = _cmul_flat_aligned(a_flat[:aligned], b_flat[:aligned])
        tail = a_flat[aligned:] * b_flat[aligned:]
        out_flat = jnp.concatenate([head, tail])

    return out_flat.reshape(orig_shape)


if __name__ == "__main__":
    key = jax.random.PRNGKey(0)
    k0, k1, k2, k3, k4, k5 = jax.random.split(key, 6)

    # 1) Small NCHW shape from the module spec, default path (small-size bypass).
    x0 = jax.random.normal(k0, (2, 4, 16, 16), dtype=jnp.float32)
    x1 = jax.random.normal(k1, (2, 4, 16, 16), dtype=jnp.float32)
    out_a = jax.block_until_ready(cmul(x0, x1))
    assert out_a.shape == x0.shape
    assert jnp.allclose(out_a, x0 * x1, atol=1e-6, rtol=1e-6)

    # 2) Same small shape forced through the Pallas kernel path.
    out_b = jax.block_until_ready(cmul(x0, x1, min_pallas_bytes=0))
    assert jnp.allclose(out_b, x0 * x1, atol=1e-6, rtol=1e-6)

    # 3) Larger aligned shape: exercises tiling, even-grid split and the
    #    masked boundary block (rows not divisible by the row tile).
    y0 = jax.random.normal(k2, (8, 64, 32, 33), dtype=jnp.float32)
    y1 = jax.random.normal(k3, (8, 64, 32, 33), dtype=jnp.float32)
    out_c = jax.block_until_ready(cmul(y0, y1))
    assert out_c.shape == y0.shape
    assert jnp.allclose(out_c, y0 * y1, atol=1e-6, rtol=1e-6)

    # 4) Ragged element count (455 = 3*128 + 71): aligned prefix via the
    #    kernel, tail via XLA, one concatenate.
    z0 = jax.random.normal(k4, (5, 7, 13), dtype=jnp.float32)
    z1 = jax.random.normal(k5, (5, 7, 13), dtype=jnp.float32)
    out_d = jax.block_until_ready(cmul(z0, z1, min_pallas_bytes=0))
    assert out_d.shape == z0.shape
    assert jnp.allclose(out_d, z0 * z1, atol=1e-6, rtol=1e-6)

    print("KERNEL_OK")
</pallas_src>

<mosaic_0001>
module attributes {stable_mosaic.version = 11 : i64} {
  func.func @_cmul_kernel(%arg0: i32, %arg1: memref<1x2048xf32, #tpu.memory_space<vmem>>, %arg2: memref<1x2048xf32, #tpu.memory_space<vmem>>, %arg3: memref<1x2048xf32, #tpu.memory_space<vmem>>) attributes {dimension_semantics = [#tpu.dimension_semantics<parallel>], iteration_bounds = array<i64: 1>, scalar_prefetch = 0 : i64, scratch_operands = 0 : i64, tpu.core_type = #tpu.core_type<tc>, window_params = [{transform_indices = @transform_0, window_bounds = array<i64: 1, 2048>}, {transform_indices = @transform_1, window_bounds = array<i64: 1, 2048>}, {transform_indices = @transform_2, window_bounds = array<i64: 1, 2048>}]} {
    %c0 = arith.constant 0 : index
    %c0_0 = arith.constant 0 : index
    %0 = vector.load %arg1[%c0, %c0_0] : memref<1x2048xf32, #tpu.memory_space<vmem>>, vector<1x2048xf32>
    %c0_1 = arith.constant 0 : index
    %c0_2 = arith.constant 0 : index
    %1 = vector.load %arg2[%c0_1, %c0_2] : memref<1x2048xf32, #tpu.memory_space<vmem>>, vector<1x2048xf32>
    %2 = arith.mulf %0, %1 : vector<1x2048xf32>
    %c0_3 = arith.constant 0 : index
    %c0_4 = arith.constant 0 : index
    %3 = vector.load %arg3[%c0_3, %c0_4] : memref<1x2048xf32, #tpu.memory_space<vmem>>, vector<1x2048xf32>
    tpu.vector_store %arg3[%c0_3, %c0_4], %2 {strides = array<i32>} : memref<1x2048xf32, #tpu.memory_space<vmem>>, vector<1x2048xf32>,
    return
  }
  func.func @transform_0(%arg0: i32) -> (i32, i32) {
    %c0_i32 = arith.constant 0 : i32
    %c0_i32_0 = arith.constant 0 : i32
    return %arg0, %c0_i32 : i32, i32
  }
  func.func @transform_1(%arg0: i32) -> (i32, i32) {
    %c0_i32 = arith.constant 0 : i32
    %c0_i32_0 = arith.constant 0 : i32
    return %arg0, %c0_i32 : i32, i32
  }
  func.func @transform_2(%arg0: i32) -> (i32, i32) {
    %c0_i32 = arith.constant 0 : i32
    %c0_i32_0 = arith.constant 0 : i32
    return %arg0, %c0_i32 : i32, i32
  }
}

</mosaic_0001>

<llo_original>
// kernel: tpu_custom_call.1
$region0: #{tpu_custom_call.1}
  #allocation0 [shape = 'u32[]', space=smem, size = 0x4, offset = 0x4, fixed_abs, tag = 'smem constant byte address 0x4 - core index']
  #allocation1 [shape = 'u32[72,128]{1,0:T(1,128)}', space=vmem, size = 0x9000, scoped, tag = 'internal scratch']
  %s0 = inlined_call_operand.hbm [shape: f32[1,2048], index: 0, kind: input, shape index: {}]
  %s1 = inlined_call_operand.hbm [shape: f32[1,2048], index: 1, kind: input, shape index: {}]
  %s2 = inlined_call_operand.hbm [shape: f32[1,2048], index: 2, kind: output, shape index: {}]
  %s3 = sld [smem:[#allocation0]]
  $region26: #{tpu_custom_call.1} parent=0
    _
  %s5 = ssub.s32 1, %s3
  %s6 = scalar_select 0, %s5, %s3
  $region1: #{tpu_custom_call.1} parent=0
    #allocation2 [shape = 'u8[8192]{0}', space=vmem, size = 0x2000, scoped, tag = 'input window, operand 0, single buffered']
    #allocation3 [shape = 's32[1]{0}', space=sflag, size = 0x4, scoped, tag = 'scoped memory for tpu_custom_call.1']
    #allocation4 [shape = 's32[1]{0}', space=sflag, size = 0x4, scoped, tag = 'scoped memory for tpu_custom_call.1']
    #allocation5 [shape = 'u8[8192]{0}', space=vmem, size = 0x2000, scoped, tag = 'input window, operand 1, single buffered']
    #allocation6 [shape = 's32[1]{0}', space=sflag, size = 0x4, scoped, tag = 'scoped memory for tpu_custom_call.1']
    #allocation7 [shape = 'u8[8192]{0}', space=vmem, size = 0x2000, scoped, tag = 'output window, operand 0, single buffered']
    %7 = vsyncpa [#allocation3], 0
    %8 = vsyncpa [#allocation6], 0
    %9 = vsyncpa [#allocation4], 0
    // Predicated region
    $region2: #{tpu_custom_call.1} parent=1 // pred_check
      _
    $region3: #{tpu_custom_call.1} parent=1 // pred_check_branch
      %11 = sbr.rel (0) target = $region5
    $region4: #{tpu_custom_call.1} parent=1 // pred_region
      %13 = vsyncadd [#allocation3], 0
      %s15 = sshll.u32 %s0, 4
      %s16 = int_to_ptr.hbm [resolvable:$true] %s15
      %s17 = sshll.u32 [#allocation2], 4
      %s18 = int_to_ptr.vmem [resolvable:$true] %s17
      %20 = dma.hbm_to_vmem [thread:$0]  %s16, 256, %s18, [#allocation3]
    $region5: #{tpu_custom_call.1} parent=1 // pred_fallthru
      _
    // Predicated region
    $region6: #{tpu_custom_call.1} parent=1 // pred_check
      _
    $region7: #{tpu_custom_call.1} parent=1 // pred_check_branch
      %22 = sbr.rel (0) target = $region9
    $region8: #{tpu_custom_call.1} parent=1 // pred_region
      %24 = vsyncadd [#allocation6], 0
      %s26 = sshll.u32 %s1, 4
      %s27 = int_to_ptr.hbm [resolvable:$true] %s26
      %s28 = sshll.u32 [#allocation5], 4
      %s29 = int_to_ptr.vmem [resolvable:$true] %s28
      %31 = dma.hbm_to_vmem [thread:$0]  %s27, 256, %s29, [#allocation6]
    $region9: #{tpu_custom_call.1} parent=1 // pred_fallthru
      _
    // Predicated region
    $region10: #{tpu_custom_call.1} parent=1 // pred_check
      _
    $region11: #{tpu_custom_call.1} parent=1 // pred_check_branch
      %33 = sbr.rel (0) target = $region13
    $region12: #{tpu_custom_call.1} parent=1 // pred_region
      %35 = dma.done [#allocation3], 256
    $region13: #{tpu_custom_call.1} parent=1 // pred_fallthru
      _
    // Predicated region
    $region14: #{tpu_custom_call.1} parent=1 // pred_check
      _
    $region15: #{tpu_custom_call.1} parent=1 // pred_check_branch
      %37 = sbr.rel (0) target = $region17
    $region16: #{tpu_custom_call.1} parent=1 // pred_region
      %39 = dma.done [#allocation6], 256
    $region17: #{tpu_custom_call.1} parent=1 // pred_fallthru
      _
    %v40 = vld [vmem:[#allocation2] sm:$0xff]
    %v41 = vld [vmem:[#allocation2 + $0x8] sm:$0xff]
    %v42 = vld [vmem:[#allocation5] sm:$0xff]
    %v43 = vld [vmem:[#allocation5 + $0x8] sm:$0xff]
    %v44 = vmul.f32 %v40, %v42
    %v45 = vmul.f32 %v41, %v43
    %46 = vst [vmem:[#allocation7] sm:$0xff] %v44
    %47 = vst [vmem:[#allocation7 + $0x8] sm:$0xff] %v45
    // Predicated region
    $region18: #{tpu_custom_call.1} parent=1 // pred_check
      _
    $region19: #{tpu_custom_call.1} parent=1 // pred_check_branch
      %49 = sbr.rel (0) target = $region21
    $region20: #{tpu_custom_call.1} parent=1 // pred_region
      %51 = vsyncadd [#allocation4], 0
      %s53 = sshll.u32 [#allocation7], 4
      %s54 = int_to_ptr.vmem [resolvable:$true] %s53
      %s55 = sshll.u32 %s2, 4
      %s56 = int_to_ptr.hbm [resolvable:$true] %s55
      %58 = dma.vmem_to_hbm [thread:$0]  %s54, 256, %s56, [#allocation4]
    $region21: #{tpu_custom_call.1} parent=1 // pred_fallthru
      _
    // Predicated region
    $region22: #{tpu_custom_call.1} parent=1 // pred_check
      _
    $region23: #{tpu_custom_call.1} parent=1 // pred_check_branch
      %60 = sbr.rel (0) target = $region25
    $region24: #{tpu_custom_call.1} parent=1 // pred_region
      %62 = dma.done [#allocation4], 256
    $region25: #{tpu_custom_call.1} parent=1 // pred_fallthru
      _
    %63 = vsyncpa [#allocation3], 1
    %64 = vsyncpa [#allocation6], 1
    %65 = vsyncpa [#allocation4], 1

</llo_original>
